<compile_context>
chip_gen: v7x
topology: tpu7x:2x2x1
jax: 0.10.0
libtpu: 0.0.40
codegen_flags: <defaults>
</compile_context>

<pallas_src>
import functools
import math

import jax
import jax.numpy as jnp
from jax.experimental import pallas as pl
from jax.experimental.pallas import tpu as pltpu

EPS = 1e-5            # nn.BatchNorm1d default
NEG_SLOPE = 0.01      # nn.LeakyReLU default
VMEM_LIMIT = 32 * 1024 * 1024


def _round_up(n, m):
    return ((n + m - 1) // m) * m


def _pick_tile(dim, max_tile, align):
    """Tile size (multiple of `align`, <= max_tile) and the padded dim."""
    t = min(max_tile, _round_up(dim, align))
    t = max(align, (t // align) * align)
    return t, _round_up(dim, t)


# ---------------------------------------------------------------------------
# Pass 1: tiled matmul z = x @ Wt with resident per-channel sum / sum-of-squares.
# grid = (j: out-col tiles, i: row tiles, k: reduction tiles)
# ---------------------------------------------------------------------------
def _linear_stats_kernel(x_ref, w_ref, z_ref, sum_ref, sq_ref, acc_ref):
    i = pl.program_id(1)
    k = pl.program_id(2)
    nk = pl.num_programs(2)

    @pl.when(k == 0)
    def _init_acc():
        acc_ref[...] = jnp.zeros_like(acc_ref)

    acc_ref[...] += jnp.dot(x_ref[...], w_ref[...],
                            preferred_element_type=jnp.float32)

    @pl.when(jnp.logical_and(i == 0, k == 0))
    def _init_stats():
        sum_ref[...] = jnp.zeros_like(sum_ref)
        sq_ref[...] = jnp.zeros_like(sq_ref)

    @pl.when(k == nk - 1)
    def _writeback():
        z = acc_ref[...]
        z_ref[...] = z
        sum_ref[...] += jnp.sum(z, axis=0, keepdims=True)
        sq_ref[...] += jnp.sum(z * z, axis=0, keepdims=True)


# ---------------------------------------------------------------------------
# Pass 2: y = LeakyReLU(z * a + b) with per-channel a, b (folded BN affine).
# ---------------------------------------------------------------------------
def _scale_shift_lrelu_kernel(z_ref, a_ref, b_ref, o_ref, *, slope):
    y = z_ref[...] * a_ref[...] + b_ref[...]
    o_ref[...] = jnp.where(y >= 0.0, y, slope * y).astype(o_ref.dtype)


# ---------------------------------------------------------------------------
# No-BN variant (use_bn=False layers and the output heads): Linear + bias
# (+ optional LeakyReLU) in a single pass.
# ---------------------------------------------------------------------------
def _linear_bias_act_kernel(x_ref, w_ref, b_ref, o_ref, acc_ref, *, slope, act):
    k = pl.program_id(2)
    nk = pl.num_programs(2)

    @pl.when(k == 0)
    def _init_acc():
        acc_ref[...] = jnp.zeros_like(acc_ref)

    acc_ref[...] += jnp.dot(x_ref[...], w_ref[...],
                            preferred_element_type=jnp.float32)

    @pl.when(k == nk - 1)
    def _writeback():
        y = acc_ref[...] + b_ref[...]
        if act:
            y = jnp.where(y >= 0.0, y, slope * y)
        o_ref[...] = y.astype(o_ref.dtype)


def _prep_operands(x, w, bias, tile_m, tile_n, tile_k):
    """Flatten leading dims, pad everything to tile-aligned f32 operands."""
    lead = x.shape[:-1]
    c_in = x.shape[-1]
    c_out = w.shape[0]
    n = math.prod(lead)

    tm, n_pad = _pick_tile(n, tile_m, 8)         # rows: sublane alignment
    tk, k_pad = _pick_tile(c_in, tile_k, 128)    # contraction: lane alignment
    tn, cout_pad = _pick_tile(c_out, tile_n, 128)

    x2d = jnp.pad(x.reshape(n, c_in).astype(jnp.float32),
                  ((0, n_pad - n), (0, k_pad - c_in)))
    wt = jnp.pad(w.astype(jnp.float32).T,
                 ((0, k_pad - c_in), (0, cout_pad - c_out)))
    b_row = jnp.pad(bias.astype(jnp.float32),
                    (0, cout_pad - c_out)).reshape(1, cout_pad)
    return lead, n, c_out, x2d, wt, b_row, (tm, tn, tk), (n_pad, cout_pad, k_pad)


def linear_bn_lrelu(x, w, bias, gamma, beta, *, eps=EPS, slope=NEG_SLOPE,
                    tile_m=256, tile_n=256, tile_k=512):
    """Fused Linear(c_in->c_out) + BatchNorm1d (training, batch stats, biased
    variance) + LeakyReLU over a (..., c_in) tensor.  w is torch-layout
    (c_out, c_in)."""
    (lead, n, c_out, x2d, wt, _b, (tm, tn, tk),
     (n_pad, cout_pad, k_pad)) = _prep_operands(x, w, bias, tile_m, tile_n, tile_k)

    grid1 = (cout_pad // tn, n_pad // tm, k_pad // tk)
    z, s1, s2 = pl.pallas_call(
        _linear_stats_kernel,
        out_shape=(
            jax.ShapeDtypeStruct((n_pad, cout_pad), jnp.float32),
            jax.ShapeDtypeStruct((1, cout_pad), jnp.float32),
            jax.ShapeDtypeStruct((1, cout_pad), jnp.float32),
        ),
        grid=grid1,
        in_specs=[
            pl.BlockSpec((tm, tk), lambda j, i, k: (i, k)),
            pl.BlockSpec((tk, tn), lambda j, i, k: (k, j)),
        ],
        out_specs=(
            pl.BlockSpec((tm, tn), lambda j, i, k: (i, j)),
            pl.BlockSpec((1, tn), lambda j, i, k: (0, j)),
            pl.BlockSpec((1, tn), lambda j, i, k: (0, j)),
        ),
        scratch_shapes=[pltpu.VMEM((tm, tn), jnp.float32)],
        compiler_params=pltpu.CompilerParams(
            dimension_semantics=("parallel", "arbitrary", "arbitrary"),
            vmem_limit_bytes=VMEM_LIMIT,
        ),
        cost_estimate=pl.CostEstimate(
            flops=2 * n_pad * cout_pad * k_pad + 4 * n_pad * cout_pad,
            transcendentals=0,
            bytes_accessed=(n_pad * k_pad + k_pad * cout_pad
                            + n_pad * cout_pad + 2 * cout_pad) * 4,
        ),
    )(x2d, wt)

    # Tiny O(C) statistics math on the host side of the kernel boundary.
    # z excludes the Linear bias; the bias shifts the mean and cancels in BN,
    # and zero-padded rows/columns contribute nothing to sum / sum-of-squares.
    inv_n = 1.0 / float(n)
    mean = s1[0] * inv_n
    var = jnp.maximum(s2[0] * inv_n - mean * mean, 0.0)      # biased variance
    a = gamma.astype(jnp.float32) * jax.lax.rsqrt(var[:c_out] + eps)
    b2 = beta.astype(jnp.float32) - mean[:c_out] * a
    a_row = jnp.pad(a, (0, cout_pad - c_out)).reshape(1, cout_pad)
    b_row = jnp.pad(b2, (0, cout_pad - c_out)).reshape(1, cout_pad)

    grid2 = (n_pad // tm, cout_pad // tn)
    out = pl.pallas_call(
        functools.partial(_scale_shift_lrelu_kernel, slope=slope),
        out_shape=jax.ShapeDtypeStruct((n_pad, cout_pad), x.dtype),
        grid=grid2,
        in_specs=[
            pl.BlockSpec((tm, tn), lambda i, j: (i, j)),
            pl.BlockSpec((1, tn), lambda i, j: (0, j)),
            pl.BlockSpec((1, tn), lambda i, j: (0, j)),
        ],
        out_specs=pl.BlockSpec((tm, tn), lambda i, j: (i, j)),
        compiler_params=pltpu.CompilerParams(
            dimension_semantics=("parallel", "parallel"),
            vmem_limit_bytes=VMEM_LIMIT,
        ),
    )(z, a_row, b_row)

    return out[:n, :c_out].reshape(*lead, c_out)


def linear_act(x, w, bias, *, act=True, slope=NEG_SLOPE,
               tile_m=256, tile_n=256, tile_k=512):
    """Fused Linear(c_in->c_out) + bias (+ optional LeakyReLU), single pass."""
    (lead, n, c_out, x2d, wt, b_row, (tm, tn, tk),
     (n_pad, cout_pad, k_pad)) = _prep_operands(x, w, bias, tile_m, tile_n, tile_k)

    grid = (n_pad // tm, cout_pad // tn, k_pad // tk)
    out = pl.pallas_call(
        functools.partial(_linear_bias_act_kernel, slope=slope, act=act),
        out_shape=jax.ShapeDtypeStruct((n_pad, cout_pad), x.dtype),
        grid=grid,
        in_specs=[
            pl.BlockSpec((tm, tk), lambda i, j, k: (i, k)),
            pl.BlockSpec((tk, tn), lambda i, j, k: (k, j)),
            pl.BlockSpec((1, tn), lambda i, j, k: (0, j)),
        ],
        out_specs=pl.BlockSpec((tm, tn), lambda i, j, k: (i, j)),
        scratch_shapes=[pltpu.VMEM((tm, tn), jnp.float32)],
        compiler_params=pltpu.CompilerParams(
            dimension_semantics=("parallel", "parallel", "arbitrary"),
            vmem_limit_bytes=VMEM_LIMIT,
        ),
    )(x2d, wt, b_row)
    return out[:n, :c_out].reshape(*lead, c_out)


# ---------------------------------------------------------------------------
# Pure-JAX references matching PyTorch semantics.
# ---------------------------------------------------------------------------
def linear_bn_lrelu_ref(x, w, bias, gamma, beta, eps=EPS, slope=NEG_SLOPE):
    xf = x.astype(jnp.float32)
    y = xf @ w.astype(jnp.float32).T + bias.astype(jnp.float32)
    y2 = y.reshape(-1, y.shape[-1])
    mean = jnp.mean(y2, axis=0)
    var = jnp.mean((y2 - mean) ** 2, axis=0)                 # biased (training)
    yn = (y - mean) * jax.lax.rsqrt(var + eps) * gamma + beta
    return jnp.where(yn >= 0.0, yn, slope * yn).astype(x.dtype)


def linear_act_ref(x, w, bias, act=True, slope=NEG_SLOPE):
    y = x.astype(jnp.float32) @ w.astype(jnp.float32).T + bias.astype(jnp.float32)
    if act:
        y = jnp.where(y >= 0.0, y, slope * y)
    return y.astype(x.dtype)


if __name__ == "__main__":
    key = jax.random.PRNGKey(0)
    ks = jax.random.split(key, 12)

    # Case 1: v_self_layers0-style block at toy sizes.
    # x = [node feats | positional PE] -> Linear(c_in, c_out//2) + BN + LeakyReLU
    B, K = 2, 8
    V_dim, p_pe_dim = 16, 8
    c_in = V_dim + p_pe_dim          # 24
    c_half = 32                      # c_out // 2
    x1 = jax.random.normal(ks[0], (B, K, c_in), dtype=jnp.float32)
    w1 = 0.2 * jax.random.normal(ks[1], (c_half, c_in), dtype=jnp.float32)
    b1 = 0.1 * jax.random.normal(ks[2], (c_half,), dtype=jnp.float32)
    g1 = 1.0 + 0.1 * jax.random.normal(ks[3], (c_half,), dtype=jnp.float32)
    be1 = 0.1 * jax.random.normal(ks[4], (c_half,), dtype=jnp.float32)
    y1 = jax.block_until_ready(linear_bn_lrelu(x1, w1, b1, g1, be1))
    r1 = linear_bn_lrelu_ref(x1, w1, b1, g1, be1)
    assert y1.shape == (B, K, c_half)
    assert jnp.allclose(y1, r1, atol=3e-2, rtol=3e-2), (
        f"case1 max diff {jnp.max(jnp.abs(y1 - r1))}")

    # Case 2: e_conv_layers-style block on K*K edge rows; small forced tiles
    # exercise the multi-step row / reduction grid and stats accumulation.
    Bl, E = 2, K * K                 # 128 edge rows per item
    c_e_in, c_e_out = 140, 96
    x2 = jax.random.normal(ks[5], (Bl, E, c_e_in), dtype=jnp.float32)
    w2 = 0.1 * jax.random.normal(ks[6], (c_e_out, c_e_in), dtype=jnp.float32)
    b2 = 0.1 * jax.random.normal(ks[7], (c_e_out,), dtype=jnp.float32)
    g2 = 1.0 + 0.1 * jax.random.normal(ks[8], (c_e_out,), dtype=jnp.float32)
    be2 = 0.1 * jax.random.normal(ks[9], (c_e_out,), dtype=jnp.float32)
    y2 = jax.block_until_ready(
        linear_bn_lrelu(x2, w2, b2, g2, be2, tile_m=32, tile_n=128, tile_k=128))
    r2 = linear_bn_lrelu_ref(x2, w2, b2, g2, be2)
    assert y2.shape == (Bl, E, c_e_out)
    assert jnp.allclose(y2, r2, atol=3e-2, rtol=3e-2), (
        f"case2 max diff {jnp.max(jnp.abs(y2 - r2))}")

    # Case 3: Linear (+ optional LeakyReLU) without BN (use_bn=False layers /
    # NaiveMLP output fc).
    out_dim = 16
    w3 = 0.2 * jax.random.normal(ks[10], (out_dim, c_half), dtype=jnp.float32)
    b3 = 0.1 * jax.random.normal(ks[11], (out_dim,), dtype=jnp.float32)
    y3 = jax.block_until_ready(linear_act(y1, w3, b3, act=True))
    r3 = linear_act_ref(y1, w3, b3, act=True)
    assert jnp.allclose(y3, r3, atol=3e-2, rtol=3e-2), (
        f"case3 max diff {jnp.max(jnp.abs(y3 - r3))}")
    y4 = jax.block_until_ready(linear_act(y1, w3, b3, act=False))
    r4 = linear_act_ref(y1, w3, b3, act=False)
    assert jnp.allclose(y4, r4, atol=3e-2, rtol=3e-2), (
        f"case4 max diff {jnp.max(jnp.abs(y4 - r4))}")

    print("KERNEL_OK")
</pallas_src>

<mosaic_0001>
module attributes {stable_mosaic.version = 11 : i64} {
  func.func @_linear_stats_kernel(%arg0: i32, %arg1: i32, %arg2: i32, %arg3: memref<16x128xf32, #tpu.memory_space<vmem>>, %arg4: memref<128x128xf32, #tpu.memory_space<vmem>>, %arg5: memref<16x128xf32, #tpu.memory_space<vmem>>, %arg6: memref<1x128xf32, #tpu.memory_space<vmem>>, %arg7: memref<1x128xf32, #tpu.memory_space<vmem>>, %arg8: memref<16x128xf32, #tpu.memory_space<vmem>>) attributes {dimension_semantics = [#tpu.dimension_semantics<parallel>, #tpu.dimension_semantics<arbitrary>, #tpu.dimension_semantics<arbitrary>], iteration_bounds = array<i64: 1, 1, 1>, scalar_prefetch = 0 : i64, scratch_operands = 1 : i64, tpu.core_type = #tpu.core_type<tc>, window_params = [{transform_indices = @transform_0, window_bounds = array<i64: 16, 128>}, {transform_indices = @transform_1, window_bounds = array<i64: 128, 128>}, {transform_indices = @transform_2, window_bounds = array<i64: 16, 128>}, {transform_indices = @transform_3, window_bounds = array<i64: 1, 128>}, {transform_indices = @transform_4, window_bounds = array<i64: 1, 128>}]} {
    %c0_i32 = arith.constant 0 : i32
    %0 = arith.cmpi eq, %arg2, %c0_i32 : i32
    %1 = arith.extui %0 : i1 to i32
    %c0_i32_0 = arith.constant 0 : i32
    %2 = arith.cmpi ne, %1, %c0_i32_0 : i32
    scf.if %2 {
      %cst_13 = arith.constant 0.000000e+00 : f32
      %17 = vector.broadcast %cst_13 : f32 to vector<16x128xf32>
      %c0_14 = arith.constant 0 : index
      %c0_15 = arith.constant 0 : index
      %18 = vector.load %arg8[%c0_14, %c0_15] : memref<16x128xf32, #tpu.memory_space<vmem>>, vector<16x128xf32>
      tpu.vector_store %arg8[%c0_14, %c0_15], %17 {strides = array<i32>} : memref<16x128xf32, #tpu.memory_space<vmem>>, vector<16x128xf32>,
    } else {
    }
    %c0 = arith.constant 0 : index
    %c0_1 = arith.constant 0 : index
    %3 = vector.load %arg8[%c0, %c0_1] : memref<16x128xf32, #tpu.memory_space<vmem>>, vector<16x128xf32>
    %c0_2 = arith.constant 0 : index
    %c0_3 = arith.constant 0 : index
    %4 = vector.load %arg3[%c0_2, %c0_3] : memref<16x128xf32, #tpu.memory_space<vmem>>, vector<16x128xf32>
    %c0_4 = arith.constant 0 : index
    %c0_5 = arith.constant 0 : index
    %5 = vector.load %arg4[%c0_4, %c0_5] : memref<128x128xf32, #tpu.memory_space<vmem>>, vector<128x128xf32>
    %cst = arith.constant dense<0.000000e+00> : vector<16x128xf32>
    %6 = tpu.matmul %4, %5, %cst {dimension_numbers = #tpu.dot_dimension_numbers<[1], [0], [0], [1], [0, 0, 1, 1], [], []>} : vector<16x128xf32>, vector<128x128xf32>, vector<16x128xf32> -> vector<16x128xf32>
    %7 = arith.addf %3, %6 : vector<16x128xf32>
    %c0_6 = arith.constant 0 : index
    %c0_7 = arith.constant 0 : index
    %8 = vector.load %arg8[%c0_6, %c0_7] : memref<16x128xf32, #tpu.memory_space<vmem>>, vector<16x128xf32>
    tpu.vector_store %arg8[%c0_6, %c0_7], %7 {strides = array<i32>} : memref<16x128xf32, #tpu.memory_space<vmem>>, vector<16x128xf32>,
    %c0_i32_8 = arith.constant 0 : i32
    %9 = arith.cmpi eq, %arg1, %c0_i32_8 : i32
    %c0_i32_9 = arith.constant 0 : i32
    %10 = arith.cmpi eq, %arg2, %c0_i32_9 : i32
    %11 = arith.andi %9, %10 : i1
    %12 = arith.extui %11 : i1 to i32
    %c0_i32_10 = arith.constant 0 : i32
    %13 = arith.cmpi ne, %12, %c0_i32_10 : i32
    scf.if %13 {
      %cst_13 = arith.constant 0.000000e+00 : f32
      %17 = vector.broadcast %cst_13 : f32 to vector<1x128xf32>
      %c0_14 = arith.constant 0 : index
      %c0_15 = arith.constant 0 : index
      %18 = vector.load %arg6[%c0_14, %c0_15] : memref<1x128xf32, #tpu.memory_space<vmem>>, vector<1x128xf32>
      tpu.vector_store %arg6[%c0_14, %c0_15], %17 {strides = array<i32>} : memref<1x128xf32, #tpu.memory_space<vmem>>, vector<1x128xf32>,
      %cst_16 = arith.constant 0.000000e+00 : f32
      %19 = vector.broadcast %cst_16 : f32 to vector<1x128xf32>
      %c0_17 = arith.constant 0 : index
      %c0_18 = arith.constant 0 : index
      %20 = vector.load %arg7[%c0_17, %c0_18] : memref<1x128xf32, #tpu.memory_space<vmem>>, vector<1x128xf32>
      tpu.vector_store %arg7[%c0_17, %c0_18], %19 {strides = array<i32>} : memref<1x128xf32, #tpu.memory_space<vmem>>, vector<1x128xf32>,
    } else {
    }
    %c0_i32_11 = arith.constant 0 : i32
    %14 = arith.cmpi eq, %arg2, %c0_i32_11 : i32
    %15 = arith.extui %14 : i1 to i32
    %c0_i32_12 = arith.constant 0 : i32
    %16 = arith.cmpi ne, %15, %c0_i32_12 : i32
    scf.if %16 {
      %c0_13 = arith.constant 0 : index
      %c0_14 = arith.constant 0 : index
      %17 = vector.load %arg8[%c0_13, %c0_14] : memref<16x128xf32, #tpu.memory_space<vmem>>, vector<16x128xf32>
      %c0_15 = arith.constant 0 : index
      %c0_16 = arith.constant 0 : index
      %18 = vector.load %arg5[%c0_15, %c0_16] : memref<16x128xf32, #tpu.memory_space<vmem>>, vector<16x128xf32>
      tpu.vector_store %arg5[%c0_15, %c0_16], %17 {strides = array<i32>} : memref<16x128xf32, #tpu.memory_space<vmem>>, vector<16x128xf32>,
      %c0_17 = arith.constant 0 : index
      %c0_18 = arith.constant 0 : index
      %19 = vector.load %arg6[%c0_17, %c0_18] : memref<1x128xf32, #tpu.memory_space<vmem>>, vector<1x128xf32>
      %cst_19 = arith.constant dense<0.000000e+00> : vector<128xf32>
      %20 = vector.multi_reduction <add>, %17, %cst_19 [0] : vector<16x128xf32> to vector<128xf32>
      %21 = vector.shape_cast %20 : vector<128xf32> to vector<1x128xf32>
      %22 = arith.addf %19, %21 : vector<1x128xf32>
      %c0_20 = arith.constant 0 : index
      %c0_21 = arith.constant 0 : index
      %23 = vector.load %arg6[%c0_20, %c0_21] : memref<1x128xf32, #tpu.memory_space<vmem>>, vector<1x128xf32>
      tpu.vector_store %arg6[%c0_20, %c0_21], %22 {strides = array<i32>} : memref<1x128xf32, #tpu.memory_space<vmem>>, vector<1x128xf32>,
      %c0_22 = arith.constant 0 : index
      %c0_23 = arith.constant 0 : index
      %24 = vector.load %arg7[%c0_22, %c0_23] : memref<1x128xf32, #tpu.memory_space<vmem>>, vector<1x128xf32>
      %25 = arith.mulf %17, %17 : vector<16x128xf32>
      %cst_24 = arith.constant dense<0.000000e+00> : vector<128xf32>
      %26 = vector.multi_reduction <add>, %25, %cst_24 [0] : vector<16x128xf32> to vector<128xf32>
      %27 = vector.shape_cast %26 : vector<128xf32> to vector<1x128xf32>
      %28 = arith.addf %24, %27 : vector<1x128xf32>
      %c0_25 = arith.constant 0 : index
      %c0_26 = arith.constant 0 : index
      %29 = vector.load %arg7[%c0_25, %c0_26] : memref<1x128xf32, #tpu.memory_space<vmem>>, vector<1x128xf32>
      tpu.vector_store %arg7[%c0_25, %c0_26], %28 {strides = array<i32>} : memref<1x128xf32, #tpu.memory_space<vmem>>, vector<1x128xf32>,
    } else {
    }
    return
  }
  func.func @transform_0(%arg0: i32, %arg1: i32, %arg2: i32) -> (i32, i32) {
    %c0_i32 = arith.constant 0 : i32
    return %arg1, %arg2 : i32, i32
  }
  func.func @transform_1(%arg0: i32, %arg1: i32, %arg2: i32) -> (i32, i32) {
    %c0_i32 = arith.constant 0 : i32
    return %arg2, %arg0 : i32, i32
  }
  func.func @transform_2(%arg0: i32, %arg1: i32, %arg2: i32) -> (i32, i32) {
    %c0_i32 = arith.constant 0 : i32
    return %arg1, %arg0 : i32, i32
  }
  func.func @transform_3(%arg0: i32, %arg1: i32, %arg2: i32) -> (i32, i32) {
    %c0_i32 = arith.constant 0 : i32
    %c0_i32_0 = arith.constant 0 : i32
    return %c0_i32, %arg0 : i32, i32
  }
  func.func @transform_4(%arg0: i32, %arg1: i32, %arg2: i32) -> (i32, i32) {
    %c0_i32 = arith.constant 0 : i32
    %c0_i32_0 = arith.constant 0 : i32
    return %c0_i32, %arg0 : i32, i32
  }
}

</mosaic_0001>

<llo_original>
// kernel: tpu_custom_call.1
$region0: #{tpu_custom_call.1}
  #allocation0 [shape = 'u32[]', space=smem, size = 0x4, offset = 0x4, fixed_abs, tag = 'smem constant byte address 0x4 - core index']
  #allocation1 [shape = 'u32[144,128]{1,0:T(1,128)}', space=vmem, size = 0x12000, scoped, tag = 'internal scratch']
  #allocation2 [shape = 'f32[16,128]{1,0:T(8,128)}', space=vmem, size = 0x2000, scoped, tag = 'scratch operand']
  %s0 = inlined_call_operand.hbm [shape: f32[16,128], index: 0, kind: input, shape index: {}]
  %s1 = inlined_call_operand.hbm [shape: f32[128,128], index: 1, kind: input, shape index: {}]
  %s2 = inlined_call_operand.hbm [shape: f32[16,128], index: 2, kind: output, shape index: {0}]
  %s3 = inlined_call_operand.hbm [shape: f32[1,128], index: 3, kind: output, shape index: {1}]
  %s4 = inlined_call_operand.hbm [shape: f32[1,128], index: 4, kind: output, shape index: {2}]
  %5 = xla_tuple %s2, %s3, %s4
  %s6 = sld [smem:[#allocation0]]
  $region54: #{tpu_custom_call.1} parent=0
    _
  %s8 = ssub.s32 1, %s6
  %s9 = scalar_select 0, %s8, %s6
  $region1: #{tpu_custom_call.1} parent=0
    #allocation3 [shape = 'u8[8192]{0}', space=vmem, size = 0x2000, scoped, tag = 'input window, operand 0, single buffered']
    #allocation4 [shape = 's32[1]{0}', space=sflag, size = 0x4, scoped, tag = 'scoped memory for tpu_custom_call.1']
    #allocation5 [shape = 's32[1]{0}', space=sflag, size = 0x4, scoped, tag = 'scoped memory for tpu_custom_call.1']
    #allocation6 [shape = 'u8[65536]{0}', space=vmem, size = 0x10000, scoped, tag = 'input window, operand 1, single buffered']
    #allocation7 [shape = 's32[1]{0}', space=sflag, size = 0x4, scoped, tag = 'scoped memory for tpu_custom_call.1']
    #allocation8 [shape = 'u8[8192]{0}', space=vmem, size = 0x2000, scoped, tag = 'output window, operand 0, single buffered']
    #allocation9 [shape = 'u8[512]{0}', space=vmem, size = 0x400, scoped, tag = 'output window, operand 1, single buffered']
    #allocation10 [shape = 's32[1]{0}', space=sflag, size = 0x4, scoped, tag = 'scoped memory for tpu_custom_call.1']
    #allocation11 [shape = 'u8[512]{0}', space=vmem, size = 0x400, scoped, tag = 'output window, operand 2, single buffered']
    %10 = vsyncpa [#allocation4], 0
    %11 = vsyncpa [#allocation7], 0
    %12 = vsyncpa [#allocation5], 0
    %13 = vsyncpa [#allocation10], 0
    // Predicated region
    $region2: #{tpu_custom_call.1} parent=1 // pred_check
      _
    $region3: #{tpu_custom_call.1} parent=1 // pred_check_branch
      %15 = sbr.rel (0) target = $region5
    $region4: #{tpu_custom_call.1} parent=1 // pred_region
      %s17 = ssub.s32 256, 256
      %18 = vsyncadd [#allocation4], %s17
      %s19 = sshll.u32 [#allocation3], 4
      %s20 = int_to_ptr.vmem [resolvable:$true] %s19
      %25 = dma.hbm_to_vmem [thread:$0]  %s0, 256, %s20, [#allocation4], 128, 128, 8
    $region5: #{tpu_custom_call.1} parent=1 // pred_fallthru
      _
    // Predicated region
    $region6: #{tpu_custom_call.1} parent=1 // pred_check
      _
    $region7: #{tpu_custom_call.1} parent=1 // pred_check_branch
      %27 = sbr.rel (0) target = $region9
    $region8: #{tpu_custom_call.1} parent=1 // pred_region
      %s29 = ssub.s32 2048, 2048
      %30 = vsyncadd [#allocation7], %s29
      %s31 = sshll.u32 [#allocation6], 4
      %s32 = int_to_ptr.vmem [resolvable:$true] %s31
      %37 = dma.hbm_to_vmem [thread:$0]  %s1, 2048, %s32, [#allocation7], 128, 128, 8
    $region9: #{tpu_custom_call.1} parent=1 // pred_fallthru
      _
    // Predicated region
    $region10: #{tpu_custom_call.1} parent=1 // pred_check
      _
    $region11: #{tpu_custom_call.1} parent=1 // pred_check_branch
      %39 = sbr.rel (0) target = $region13
    $region12: #{tpu_custom_call.1} parent=1 // pred_region
      %40 = dma.done [#allocation4], 256
    $region13: #{tpu_custom_call.1} parent=1 // pred_fallthru
      _
    // Predicated region
    $region14: #{tpu_custom_call.1} parent=1 // pred_check
      _
    $region15: #{tpu_custom_call.1} parent=1 // pred_check_branch
      %42 = sbr.rel (0) target = $region17
    $region16: #{tpu_custom_call.1} parent=1 // pred_region
      %43 = dma.done [#allocation7], 2048
    $region17: #{tpu_custom_call.1} parent=1 // pred_fallthru
      _
    %p44 = scmp.eq.s32.totalorder 0, 0
    // Predicated region
    $region18: #{tpu_custom_call.1} parent=1 // pred_check
      %p45 = pneg %p44
    $region19: #{tpu_custom_call.1} parent=1 // pred_check_branch
      %47 = sbr.rel (%p45) target = $region21
    $region20: #{tpu_custom_call.1} parent=1 // pred_region
      %48 = vst [vmem:[#allocation2] sm:$0xff] 0.0
      %49 = vst [vmem:[#allocation2 + $0x8] sm:$0xff] 0.0
    $region21: #{tpu_custom_call.1} parent=1 // pred_fallthru
      _
    %v50 = vld [vmem:[#allocation2] sm:$0xff]
    %v51 = vld [vmem:[#allocation2 + $0x8] sm:$0xff]
    %v52 = vld [vmem:[#allocation3] sm:$0xff]
    %v53 = vld [vmem:[#allocation3 + $0x8] sm:$0xff]
    %v54 = vld [vmem:[#allocation6] sm:$0xff]
    %v55 = vld [vmem:[#allocation6 + $0x8] sm:$0xff]
    %v56 = vld [vmem:[#allocation6 + $0x10] sm:$0xff]
    %v57 = vld [vmem:[#allocation6 + $0x18] sm:$0xff]
    %v58 = vld [vmem:[#allocation6 + $0x20] sm:$0xff]
    %v59 = vld [vmem:[#allocation6 + $0x28] sm:$0xff]
    %v60 = vld [vmem:[#allocation6 + $0x30] sm:$0xff]
    %v61 = vld [vmem:[#allocation6 + $0x38] sm:$0xff]
    %v62 = vld [vmem:[#allocation6 + $0x40] sm:$0xff]
    %v63 = vld [vmem:[#allocation6 + $0x48] sm:$0xff]
    %v64 = vld [vmem:[#allocation6 + $0x50] sm:$0xff]
    %v65 = vld [vmem:[#allocation6 + $0x58] sm:$0xff]
    %v66 = vld [vmem:[#allocation6 + $0x60] sm:$0xff]
    %v67 = vld [vmem:[#allocation6 + $0x68] sm:$0xff]
    %v68 = vld [vmem:[#allocation6 + $0x70] sm:$0xff]
    %v69 = vld [vmem:[#allocation6 + $0x78] sm:$0xff]
    %70 = vmatprep.subr.mxu0 0.0
    %71 = vmatpush1.msra.mxu0 %v54
    %72 = vmatprep.subr.mxu0 0.0
    %73 = vmatpush1.msra.mxu0 %v55
    %74 = vmatprep.subr.mxu0 0.0
    %75 = vmatpush1.msra.mxu0 %v56
    %76 = vmatprep.subr.mxu0 0.0
    %77 = vmatpush1.msra.mxu0 %v57
    %78 = vmatprep.subr.mxu0 0.0
    %79 = vmatpush1.msra.mxu0 %v58
    %80 = vmatprep.subr.mxu0 0.0
    %81 = vmatpush1.msra.mxu0 %v59
    %82 = vmatprep.subr.mxu0 0.0
    %83 = vmatpush1.msra.mxu0 %v60
    %84 = vmatprep.subr.mxu0 0.0
    %85 = vmatpush1.msra.mxu0 %v61
    %86 = vmatprep.subr.mxu0 0.0
    %87 = vmatpush1.msra.mxu0 %v62
    %88 = vmatprep.subr.mxu0 0.0
    %89 = vmatpush1.msra.mxu0 %v63
    %90 = vmatprep.subr.mxu0 0.0
    %91 = vmatpush1.msra.mxu0 %v64
    %92 = vmatprep.subr.mxu0 0.0
    %93 = vmatpush1.msra.mxu0 %v65
    %94 = vmatprep.subr.mxu0 0.0
    %95 = vmatpush1.msra.mxu0 %v66
    %96 = vmatprep.subr.mxu0 0.0
    %97 = vmatpush1.msra.mxu0 %v67
    %98 = vmatprep.subr.mxu0 0.0
    %99 = vmatpush1.msra.mxu0 %v68
    %100 = vmatprep.subr.mxu0 0.0
    %101 = vmatpush1.msra.mxu0 %v69
    %102 = vmatprep.subr.mxu0 0.0
    %103 = vmatpush1.msra.mxu0 0.0
    %104 = vmatprep.subr.mxu0 0.0
    %105 = vmatpush1.msra.mxu0 0.0
    %106 = vmatprep.subr.mxu0 0.0
    %107 = vmatpush1.msra.mxu0 0.0
    %108 = vmatprep.subr.mxu0 0.0
    %109 = vmatpush1.msra.mxu0 0.0
    %110 = vmatprep.subr.mxu0 0.0
    %111 = vmatpush1.msra.mxu0 0.0
    %112 = vmatprep.subr.mxu0 0.0
    %113 = vmatpush1.msra.mxu0 0.0
    %114 = vmatprep.subr.mxu0 0.0
    %115 = vmatpush1.msra.mxu0 0.0
    %116 = vmatprep.subr.mxu0 0.0
    %117 = vmatpush1.msra.mxu0 0.0
    %118 = vmatprep.subr.mxu0 0.0
    %119 = vmatpush1.msra.mxu0 0.0
    %120 = vmatprep.subr.mxu0 0.0
    %121 = vmatpush1.msra.mxu0 0.0
    %122 = vmatprep.subr.mxu0 0.0
    %123 = vmatpush1.msra.mxu0 0.0
    %124 = vmatprep.subr.mxu0 0.0
    %125 = vmatpush1.msra.mxu0 0.0
    %126 = vmatprep.subr.mxu0 0.0
    %127 = vmatpush1.msra.mxu0 0.0
    %128 = vmatprep.subr.mxu0 0.0
    %129 = vmatpush1.msra.mxu0 0.0
    %130 = vmatprep.subr.mxu0 0.0
    %131 = vmatpush1.msra.mxu0 0.0
    %132 = vmatprep.subr.mxu0 0.0
    %133 = vmatpush1.msra.mxu0 0.0
    %134 = vmatprep.mubr.f32.mxu0 0.0
    %135 = vmatmul.mubr.f32.gmra.mrb[0].mxu0 %v52
    %v136 = vpop.f32.mrb[0].mxu0
    %v137 = vadd.f32 0.0, %v136
    %v138 = vpop.f32.mrb[0].mxu0
    %139 = vmatprep.mubr.f32.mxu0 0.0
    %140 = vmatmul.mubr.f32.gmra.mrb[0].mxu0 %v53
    %v141 = vpop.f32.mrb[0].mxu0
    %v142 = vadd.f32 0.0, %v141
    %v143 = vpop.f32.mrb[0].mxu0
    %144 = vdwg.mxu0
    %v145 = vadd.f32 %v50, %v137
    %v146 = vadd.f32 %v51, %v142
    %147 = vst [vmem:[#allocation2] sm:$0xff] %v145
    %148 = vst [vmem:[#allocation2 + $0x8] sm:$0xff] %v146
    %p149 = scmp.eq.s32.totalorder 0, 0
    %p150 = pnand %p149, %p44
    %p151 = pneg %p150
    // Predicated region
    $region22: #{tpu_custom_call.1} parent=1 // pred_check
      _
    $region23: #{tpu_custom_call.1} parent=1 // pred_check_branch
      %153 = sbr.rel (%p150) target = $region25
    $region24: #{tpu_custom_call.1} parent=1 // pred_region
      %154 = vst [vmem:[#allocation9] sm:$0x1] 0.0
      %155 = vst [vmem:[#allocation11] sm:$0x1] 0.0
    $region25: #{tpu_custom_call.1} parent=1 // pred_fallthru
      _
    // Predicated region
    $region26: #{tpu_custom_call.1} parent=1 // pred_check
      %p156 = pneg %p44
    $region27: #{tpu_custom_call.1} parent=1 // pred_check_branch
      %158 = sbr.rel (%p156) target = $region29
    $region28: #{tpu_custom_call.1} parent=1 // pred_region
      %v159 = vld [vmem:[#allocation2] sm:$0xff]
      %v160 = vld [vmem:[#allocation2 + $0x8] sm:$0xff]
      %161 = vst [vmem:[#allocation8] sm:$0xff] %v159
      %162 = vst [vmem:[#allocation8 + $0x8] sm:$0xff] %v160
      %v163 = vld [vmem:[#allocation9] sm:$0x1]
      %v164 = vadd.f32 %v159, %v160
      %v165 = vrot.slane %v164, 4
      %v166 = vadd.f32 %v164, %v165
      %v167 = vrot.slane %v166, 2
      %v168 = vadd.f32 %v166, %v167
      %v169 = vrot.slane %v168, 1
      %v170 = vadd.f32 %v168, %v169
      %v171 = vadd.f32 %v163, %v170
      %172 = vst [vmem:[#allocation9] sm:$0x1] %v171
      %v173 = vld [vmem:[#allocation11] sm:$0x1]
      %v174 = vmul.f32 %v159, %v159
      %v175 = vmul.f32 %v160, %v160
      %v176 = vadd.f32 %v174, %v175
      %v177 = vrot.slane %v176, 4
      %v178 = vadd.f32 %v176, %v177
      %v179 = vrot.slane %v178, 2
      %v180 = vadd.f32 %v178, %v179
      %v181 = vrot.slane %v180, 1
      %v182 = vadd.f32 %v180, %v181
      %v183 = vadd.f32 %v173, %v182
      %184 = vst [vmem:[#allocation11] sm:$0x1] %v183
    $region29: #{tpu_custom_call.1} parent=1 // pred_fallthru
      _
    // Predicated region
    $region30: #{tpu_custom_call.1} parent=1 // pred_check
      _
    $region31: #{tpu_custom_call.1} parent=1 // pred_check_branch
      %186 = sbr.rel (0) target = $region33
    $region32: #{tpu_custom_call.1} parent=1 // pred_region
      %s188 = ssub.s32 256, 256
      %189 = vsyncadd [#allocation5], %s188
      %s190 = sshll.u32 [#allocation8], 4
      %s191 = int_to_ptr.vmem [resolvable:$true] %s190
      %196 = dma.vmem_to_hbm [thread:$0]  %s191, 256, %s2, [#allocation5], 128, 128, 8
    $region33: #{tpu_custom_call.1} parent=1 // pred_fallthru
      _
    // Predicated region
    $region34: #{tpu_custom_call.1} parent=1 // pred_check
      _
    $region35: #{tpu_custom_call.1} parent=1 // pred_check_branch
      %198 = sbr.rel (0) target = $region37
    $region36: #{tpu_custom_call.1} parent=1 // pred_region
      %s200 = ssub.s32 16, 16
      %201 = vsyncadd [#allocation10], %s200
      %s203 = sshll.u32 [#allocation9], 4
      %s204 = int_to_ptr.vmem [resolvable:$true] %s203
      %206 = dma.vmem_to_hbm [thread:$0]  %s204, 16, %s3, [#allocation10]
    $region37: #{tpu_custom_call.1} parent=1 // pred_fallthru
      _
    // Predicated region
    $region38: #{tpu_custom_call.1} parent=1 // pred_check
      _
    $region39: #{tpu_custom_call.1} parent=1 // pred_check_branch
      %208 = sbr.rel (0) target = $region41
    $region40: #{tpu_custom_call.1} parent=1 // pred_region
      %s210 = ssub.s32 16, 16
      %211 = vsyncadd [#allocation10], %s210
      %s213 = sshll.u32 [#allocation11], 4
      %s214 = int_to_ptr.vmem [resolvable:$true] %s213
      %216 = dma.vmem_to_hbm [thread:$0]  %s214, 16, %s4, [#allocation10]
    $region41: #{tpu_custom_call.1} parent=1 // pred_fallthru
      _
    // Predicated region
    $region42: #{tpu_custom_call.1} parent=1 // pred_check
      _
    $region43: #{tpu_custom_call.1} parent=1 // pred_check_branch
      %218 = sbr.rel (0) target = $region45
    $region44: #{tpu_custom_call.1} parent=1 // pred_region
      %219 = dma.done [#allocation5], 256
    $region45: #{tpu_custom_call.1} parent=1 // pred_fallthru
      _
    // Predicated region
    $region46: #{tpu_custom_call.1} parent=1 // pred_check
      _
    $region47: #{tpu_custom_call.1} parent=1 // pred_check_branch
      %221 = sbr.rel (0) target = $region49
    $region48: #{tpu_custom_call.1} parent=1 // pred_region
      %222 = dma.done [#allocation10], 16
    $region49: #{tpu_custom_call.1} parent=1 // pred_fallthru
      _
    // Predicated region
    $region50: #{tpu_custom_call.1} parent=1 // pred_check
      _
    $region51: #{tpu_custom_call.1} parent=1 // pred_check_branch
      %224 = sbr.rel (0) target = $region53
    $region52: #{tpu_custom_call.1} parent=1 // pred_region
      %225 = dma.done [#allocation10], 16
    $region53: #{tpu_custom_call.1} parent=1 // pred_fallthru
      _
    %226 = vsyncpa [#allocation4], 1
    %227 = vsyncpa [#allocation7], 1
    %228 = vsyncpa [#allocation5], 1
    %229 = vsyncpa [#allocation10], 1

</llo_original>
